<compile_context>
chip_gen: v6e
topology: v6e:2x2x1
jax: 0.10.0
libtpu: 0.0.40
codegen_flags: <defaults>
</compile_context>

<pallas_src>
import functools

import jax
import jax.numpy as jnp
from jax.experimental import pallas as pl
from jax.experimental.pallas import tpu as pltpu


def _round_up(x: int, m: int) -> int:
    return ((x + m - 1) // m) * m


@functools.lru_cache(maxsize=None)
def _vmem_capacity_bytes() -> int:
    """Physical VMEM per TensorCore; conservative 64 MiB (v7x) fallback."""
    try:
        cap = int(getattr(pltpu.get_tpu_info(), "vmem_capacity_bytes"))
        if cap > 0:
            return cap
    except Exception:
        pass
    return 64 * 1024 * 1024


def _pick_tiles(M, K, N, in_itemsize, out_itemsize, budget):
    """Weight-stationary tile selection under a VMEM working-set budget."""
    sub = {1: 32, 2: 16}.get(in_itemsize, 8)   # sublane packing per dtype

    def footprint(tm, tn):
        # Assume every pipelined operand holds two buffers (conservative).
        return 2 * (tm * K * in_itemsize        # activation tile
                    + tn * K * in_itemsize      # weight tile
                    + tn * 4                    # f32 bias tile
                    + tm * tn * out_itemsize)   # output tile

    # Prefer the whole weight resident (tn == N -> weight read from HBM once);
    # only shrink tn (in 128-lane multiples) if it cannot possibly fit.
    tn = N
    while tn > 128 and footprint(sub, tn) > budget:
        tn = max(128, _round_up(tn // 2, 128))

    # Largest sublane-aligned M tile (<= 1024) that fits alongside the weight.
    tm = min(1024, _round_up(M, sub))
    while tm > sub and footprint(tm, tn) > budget:
        tm = max(sub, _round_up(tm // 2, sub))

    return tm, tn, footprint(tm, tn)


def _intermediate_kernel(x_ref, w_ref, b_ref, o_ref):
    # x_ref: (tm, K)   w_ref: (tn, K)  [PyTorch nn.Linear layout]
    # b_ref: (1, tn) f32               o_ref: (tm, tn)
    acc = jax.lax.dot_general(
        x_ref[...], w_ref[...],
        dimension_numbers=(((1,), (1,)), ((), ())),   # contract K with K (B^T)
        preferred_element_type=jnp.float32,
    )
    acc = acc + b_ref[...]
    # TODO(synk): HF's default "gelu" is the exact erf form; the tanh
    # approximation is used here (guaranteed Mosaic lowering, EUP tanh);
    # max abs deviation vs exact GELU is ~3e-3.
    o_ref[...] = jax.nn.gelu(acc, approximate=True).astype(o_ref.dtype)


@jax.jit
def vit_intermediate(hidden_states, weight, bias):
    """hidden_states: (B, S, K); weight: (N, K) [PyTorch nn.Linear layout];
    bias: (N,).  Returns gelu(hidden_states @ weight.T + bias): (B, S, N)."""
    B, S, K = hidden_states.shape
    N, K_w = weight.shape
    assert K_w == K, (K_w, K)
    M = B * S

    x2d = hidden_states.reshape(M, K)                 # free (contiguous)
    b2d = bias.reshape(1, N).astype(jnp.float32)      # single up-front cast

    in_itemsize = jnp.dtype(hidden_states.dtype).itemsize
    out_dtype = hidden_states.dtype
    out_itemsize = jnp.dtype(out_dtype).itemsize

    cap = _vmem_capacity_bytes()
    budget = int(cap * 0.7)                           # working-set budget
    tm, tn, fp = _pick_tiles(M, K, N, in_itemsize, out_itemsize, budget)

    grid_m = pl.cdiv(M, tm)
    grid_n = pl.cdiv(N, tn)
    # n outer / m inner: the weight block index only changes with n, so with
    # tn == N (the common case) the weight is DMA'd exactly once.
    grid = (grid_n, grid_m)

    vmem_limit = int(min(max(int(fp * 1.25) + (2 << 20), 32 << 20),
                         cap - (4 << 20)))

    cost = pl.CostEstimate(
        flops=2 * M * K * N,
        transcendentals=M * N,
        bytes_accessed=(M * K + N * K) * in_itemsize
                       + M * N * out_itemsize + N * 4,
    )

    out2d = pl.pallas_call(
        _intermediate_kernel,
        out_shape=jax.ShapeDtypeStruct((M, N), out_dtype),
        grid_spec=pltpu.PrefetchScalarGridSpec(
            num_scalar_prefetch=0,
            grid=grid,
            in_specs=[
                pl.BlockSpec((tm, K), lambda n, m: (m, 0)),   # activations
                pl.BlockSpec((tn, K), lambda n, m: (n, 0)),   # weight (N, K)
                pl.BlockSpec((1, tn), lambda n, m: (0, n)),   # bias (f32)
            ],
            out_specs=pl.BlockSpec((tm, tn), lambda n, m: (m, n)),
        ),
        compiler_params=pltpu.CompilerParams(
            dimension_semantics=("parallel", "parallel"),
            vmem_limit_bytes=vmem_limit,
        ),
        cost_estimate=cost,
    )(x2d, weight, b2d)

    return out2d.reshape(B, S, N)


if __name__ == "__main__":
    # Small synthetic config: batch=2, seq=8, hidden=32, intermediate=128.
    B, S, HIDDEN, INTER = 2, 8, 32, 128

    key = jax.random.PRNGKey(0)
    k_x, k_w, k_b = jax.random.split(key, 3)
    hidden_states = jax.random.normal(k_x, (B, S, HIDDEN), dtype=jnp.float32)
    # nn.Linear(hidden, intermediate): weight (intermediate, hidden), bias (intermediate,)
    weight = jax.random.normal(k_w, (INTER, HIDDEN), dtype=jnp.float32) * 0.02
    bias = jax.random.normal(k_b, (INTER,), dtype=jnp.float32) * 0.02

    out = vit_intermediate(hidden_states, weight, bias)
    out = jax.block_until_ready(out)

    # Reference: dense + GELU in plain JAX (same tanh-approximate GELU).
    ref = jnp.einsum("bsk,nk->bsn", hidden_states, weight,
                     precision=jax.lax.Precision.HIGHEST) + bias
    ref = jax.nn.gelu(ref, approximate=True)

    assert out.shape == (B, S, INTER)
    assert jnp.allclose(out, ref, atol=1e-4, rtol=1e-4), (
        float(jnp.max(jnp.abs(out - ref))))

    print("KERNEL_OK")
</pallas_src>

<mosaic_0001>
module attributes {stable_mosaic.version = 11 : i64} {
  func.func @_intermediate_kernel(%arg0: i32, %arg1: i32, %arg2: memref<16x32xf32, #tpu.memory_space<vmem>>, %arg3: memref<128x32xf32, #tpu.memory_space<vmem>>, %arg4: memref<1x128xf32, #tpu.memory_space<vmem>>, %arg5: memref<16x128xf32, #tpu.memory_space<vmem>>) attributes {dimension_semantics = [#tpu.dimension_semantics<parallel>, #tpu.dimension_semantics<parallel>], iteration_bounds = array<i64: 1, 1>, scalar_prefetch = 0 : i64, scratch_operands = 0 : i64, tpu.core_type = #tpu.core_type<tc>, window_params = [{transform_indices = @transform_0, window_bounds = array<i64: 16, 32>}, {transform_indices = @transform_1, window_bounds = array<i64: 128, 32>}, {transform_indices = @transform_2, window_bounds = array<i64: 1, 128>}, {transform_indices = @transform_3, window_bounds = array<i64: 16, 128>}]} {
    %c0 = arith.constant 0 : index
    %c0_0 = arith.constant 0 : index
    %0 = vector.load %arg2[%c0, %c0_0] : memref<16x32xf32, #tpu.memory_space<vmem>>, vector<16x32xf32>
    %c0_1 = arith.constant 0 : index
    %c0_2 = arith.constant 0 : index
    %1 = vector.load %arg3[%c0_1, %c0_2] : memref<128x32xf32, #tpu.memory_space<vmem>>, vector<128x32xf32>
    %cst = arith.constant dense<0.000000e+00> : vector<16x128xf32>
    %2 = tpu.matmul %0, %1, %cst {dimension_numbers = #tpu.dot_dimension_numbers<[1], [1], [0], [0], [0, 0, 1, 0], [], []>} : vector<16x32xf32>, vector<128x32xf32>, vector<16x128xf32> -> vector<16x128xf32>
    %c0_3 = arith.constant 0 : index
    %c0_4 = arith.constant 0 : index
    %3 = vector.load %arg4[%c0_3, %c0_4] : memref<1x128xf32, #tpu.memory_space<vmem>>, vector<1x128xf32>
    %4 = vector.broadcast %3 : vector<1x128xf32> to vector<16x128xf32>
    %5 = arith.addf %2, %4 : vector<16x128xf32>
    %6 = arith.mulf %5, %5 : vector<16x128xf32>
    %7 = arith.mulf %5, %6 : vector<16x128xf32>
    %cst_5 = arith.constant 4.471500e-02 : f32
    %8 = vector.broadcast %cst_5 : f32 to vector<16x128xf32>
    %9 = arith.mulf %8, %7 : vector<16x128xf32>
    %10 = arith.addf %5, %9 : vector<16x128xf32>
    %cst_6 = arith.constant 0.797884583 : f32
    %11 = vector.broadcast %cst_6 : f32 to vector<16x128xf32>
    %12 = arith.mulf %11, %10 : vector<16x128xf32>
    %13 = math.tanh %12 : vector<16x128xf32>
    %cst_7 = arith.constant 1.000000e+00 : f32
    %14 = vector.broadcast %cst_7 : f32 to vector<16x128xf32>
    %15 = arith.addf %14, %13 : vector<16x128xf32>
    %cst_8 = arith.constant 5.000000e-01 : f32
    %16 = vector.broadcast %cst_8 : f32 to vector<16x128xf32>
    %17 = arith.mulf %16, %15 : vector<16x128xf32>
    %18 = arith.mulf %5, %17 : vector<16x128xf32>
    %c0_9 = arith.constant 0 : index
    %c0_10 = arith.constant 0 : index
    %19 = vector.load %arg5[%c0_9, %c0_10] : memref<16x128xf32, #tpu.memory_space<vmem>>, vector<16x128xf32>
    tpu.vector_store %arg5[%c0_9, %c0_10], %18 {strides = array<i32>} : memref<16x128xf32, #tpu.memory_space<vmem>>, vector<16x128xf32>,
    return
  }
  func.func @transform_0(%arg0: i32, %arg1: i32) -> (i32, i32) {
    %c0_i32 = arith.constant 0 : i32
    %c0_i32_0 = arith.constant 0 : i32
    return %arg1, %c0_i32 : i32, i32
  }
  func.func @transform_1(%arg0: i32, %arg1: i32) -> (i32, i32) {
    %c0_i32 = arith.constant 0 : i32
    %c0_i32_0 = arith.constant 0 : i32
    return %arg0, %c0_i32 : i32, i32
  }
  func.func @transform_2(%arg0: i32, %arg1: i32) -> (i32, i32) {
    %c0_i32 = arith.constant 0 : i32
    %c0_i32_0 = arith.constant 0 : i32
    return %c0_i32, %arg0 : i32, i32
  }
  func.func @transform_3(%arg0: i32, %arg1: i32) -> (i32, i32) {
    %c0_i32 = arith.constant 0 : i32
    return %arg1, %arg0 : i32, i32
  }
}

</mosaic_0001>

<llo_original>
// kernel: vit_intermediate.1
$region0: #{vit_intermediate.1}
  #allocation0 [shape = 'u32[]', space=smem, size = 0x4, offset = 0x4, fixed_abs, tag = 'smem constant byte address 0x4 - core index']
  #allocation1 [shape = 'u32[144,128]{1,0:T(1,128)}', space=vmem, size = 0x12000, scoped, tag = 'internal scratch']
  %s0 = inlined_call_operand.vmem [shape: f32[16,32], index: 0, kind: input, shape index: {}]
  %s1 = inlined_call_operand.vmem [shape: f32[128,32], index: 1, kind: input, shape index: {}]
  %s2 = inlined_call_operand.vmem [shape: f32[1,128], index: 2, kind: input, shape index: {}]
  %s3 = inlined_call_operand.hbm [shape: f32[16,128], index: 3, kind: output, shape index: {}]
  %s4 = sld [smem:[#allocation0]]
  $region22: #{vit_intermediate.1} parent=0
    _
  %s6 = ssub.s32 1, %s4
  %s7 = scalar_select 0, %s6, %s4
  $region1: #{vit_intermediate.1} parent=0
    #allocation2 [shape = 'u8[8192]{0}', space=vmem, size = 0x2000, scoped, tag = 'output window, operand 0, single buffered']
    #allocation3 [shape = 's32[1]{0}', space=sflag, size = 0x4, scoped, tag = 'scoped memory for vit_intermediate.1']
    %8 = vsyncpa [#allocation3], 0
    // Predicated region
    $region2: #{vit_intermediate.1} parent=1 // pred_check
      _
    $region3: #{vit_intermediate.1} parent=1 // pred_check_branch
      %10 = sbr.rel (0) target = $region5
    $region4: #{vit_intermediate.1} parent=1 // pred_region
      _
    $region5: #{vit_intermediate.1} parent=1 // pred_fallthru
      _
    // Predicated region
    $region6: #{vit_intermediate.1} parent=1 // pred_check
      _
    $region7: #{vit_intermediate.1} parent=1 // pred_check_branch
      %12 = sbr.rel (0) target = $region9
    $region8: #{vit_intermediate.1} parent=1 // pred_region
      _
    $region9: #{vit_intermediate.1} parent=1 // pred_fallthru
      _
    // Predicated region
    $region10: #{vit_intermediate.1} parent=1 // pred_check
      _
    $region11: #{vit_intermediate.1} parent=1 // pred_check_branch
      %14 = sbr.rel (0) target = $region13
    $region12: #{vit_intermediate.1} parent=1 // pred_region
      _
    $region13: #{vit_intermediate.1} parent=1 // pred_fallthru
      _
    %v15 = vld [vmem:[%s0] sm:$0xff]
    %v16 = vld [vmem:[%s0 + $0x8] sm:$0xff]
    %v17 = vld [vmem:[%s1] sm:$0xff]
    %v18 = vld [vmem:[%s1 + $0x8] sm:$0xff]
    %v19 = vld [vmem:[%s1 + $0x10] sm:$0xff]
    %v20 = vld [vmem:[%s1 + $0x18] sm:$0xff]
    %v21 = vld [vmem:[%s1 + $0x20] sm:$0xff]
    %v22 = vld [vmem:[%s1 + $0x28] sm:$0xff]
    %v23 = vld [vmem:[%s1 + $0x30] sm:$0xff]
    %v24 = vld [vmem:[%s1 + $0x38] sm:$0xff]
    %v25 = vld [vmem:[%s1 + $0x40] sm:$0xff]
    %v26 = vld [vmem:[%s1 + $0x48] sm:$0xff]
    %v27 = vld [vmem:[%s1 + $0x50] sm:$0xff]
    %v28 = vld [vmem:[%s1 + $0x58] sm:$0xff]
    %v29 = vld [vmem:[%s1 + $0x60] sm:$0xff]
    %v30 = vld [vmem:[%s1 + $0x68] sm:$0xff]
    %v31 = vld [vmem:[%s1 + $0x70] sm:$0xff]
    %v32 = vld [vmem:[%s1 + $0x78] sm:$0xff]
    %v33 = vld [vmem:[%s2] sm:$0x1]
    %v35 = vlaneseq
    %v36 = vshrl.u32 %v35, 7
    %v37 = vsub.s32 0, %v36
    %v38 = vrot.slane %v33, %v37
    %vm40 = vcmask 261120
    %v42 = vsel %vm40, %v15, 0
    %v45 = vsel %vm40, %v16, 0
    %v48 = vsel %vm40, %v17, 0
    %v51 = vsel %vm40, %v18, 0
    %v54 = vsel %vm40, %v19, 0
    %v57 = vsel %vm40, %v20, 0
    %v60 = vsel %vm40, %v21, 0
    %v63 = vsel %vm40, %v22, 0
    %v66 = vsel %vm40, %v23, 0
    %v69 = vsel %vm40, %v24, 0
    %v72 = vsel %vm40, %v25, 0
    %v75 = vsel %vm40, %v26, 0
    %v78 = vsel %vm40, %v27, 0
    %v81 = vsel %vm40, %v28, 0
    %v84 = vsel %vm40, %v29, 0
    %v87 = vsel %vm40, %v30, 0
    %v90 = vsel %vm40, %v31, 0
    %v93 = vsel %vm40, %v32, 0
    %95 = vmatprep.subr.mxu0 0.0
    %96 = vmatpush1.xpose.msra.mxu0 %v93
    %97 = vmatprep.subr.mxu0 0.0
    %98 = vmatpush1.xpose.msra.mxu0 %v90
    %99 = vmatprep.subr.mxu0 0.0
    %100 = vmatpush1.xpose.msra.mxu0 %v87
    %101 = vmatprep.subr.mxu0 0.0
    %102 = vmatpush1.xpose.msra.mxu0 %v84
    %103 = vmatprep.subr.mxu0 0.0
    %104 = vmatpush1.xpose.msra.mxu0 %v81
    %105 = vmatprep.subr.mxu0 0.0
    %106 = vmatpush1.xpose.msra.mxu0 %v78
    %107 = vmatprep.subr.mxu0 0.0
    %108 = vmatpush1.xpose.msra.mxu0 %v75
    %109 = vmatprep.subr.mxu0 0.0
    %110 = vmatpush1.xpose.msra.mxu0 %v72
    %111 = vmatprep.subr.mxu0 0.0
    %112 = vmatpush1.xpose.msra.mxu0 %v69
    %113 = vmatprep.subr.mxu0 0.0
    %114 = vmatpush1.xpose.msra.mxu0 %v66
    %115 = vmatprep.subr.mxu0 0.0
    %116 = vmatpush1.xpose.msra.mxu0 %v63
    %117 = vmatprep.subr.mxu0 0.0
    %118 = vmatpush1.xpose.msra.mxu0 %v60
    %119 = vmatprep.subr.mxu0 0.0
    %120 = vmatpush1.xpose.msra.mxu0 %v57
    %121 = vmatprep.subr.mxu0 0.0
    %122 = vmatpush1.xpose.msra.mxu0 %v54
    %123 = vmatprep.subr.mxu0 0.0
    %124 = vmatpush1.xpose.msra.mxu0 %v51
    %125 = vmatprep.subr.mxu0 0.0
    %126 = vmatpush1.xpose.msra.mxu0 %v48
    %127 = vmatprep.subr.mxu0 0.0
    %128 = vmatpush2.xpose.msra.mxu0 0.0
    %129 = vmatprep.subr.mxu0 0.0
    %130 = vmatpush2.xpose.msra.mxu0 0.0
    %131 = vmatprep.subr.mxu0 0.0
    %132 = vmatpush2.xpose.msra.mxu0 0.0
    %133 = vmatprep.subr.mxu0 0.0
    %134 = vmatpush2.xpose.msra.mxu0 0.0
    %135 = vmatprep.subr.mxu0 0.0
    %136 = vmatpush2.xpose.msra.mxu0 0.0
    %137 = vmatprep.subr.mxu0 0.0
    %138 = vmatpush2.xpose.msra.mxu0 0.0
    %139 = vmatprep.subr.mxu0 0.0
    %140 = vmatpush2.xpose.msra.mxu0 0.0
    %141 = vmatprep.subr.mxu0 0.0
    %142 = vmatpush2.xpose.msra.mxu0 0.0
    %143 = vmatprep.subr.mxu0 0.0
    %144 = vmatpush2.xpose.msra.mxu0 0.0
    %145 = vmatprep.subr.mxu0 0.0
    %146 = vmatpush2.xpose.msra.mxu0 0.0
    %147 = vmatprep.subr.mxu0 0.0
    %148 = vmatpush2.xpose.msra.mxu0 0.0
    %149 = vmatprep.subr.mxu0 0.0
    %150 = vmatpush2.xpose.msra.mxu0 0.0
    %151 = vmatprep.subr.mxu0 0.0
    %152 = vmatpush2.xpose.msra.mxu0 0.0
    %153 = vmatprep.subr.mxu0 0.0
    %154 = vmatpush2.xpose.msra.mxu0 0.0
    %155 = vmatprep.subr.mxu0 0.0
    %156 = vmatpush2.xpose.msra.mxu0 0.0
    %157 = vmatprep.subr.mxu0 0.0
    %158 = vmatpush2.xpose.msra.mxu0 0.0
    %159 = vmatprep.mubr.f32.mxu0 0.0
    %160 = vmatmul.mubr.f32.gmra.mxu0 %v42
    %v161 = vpop.f32.mrf.mxu0
    %v162 = vadd.f32 %v38, %v161
    %v163 = vpop.f32.mrf.mxu0
    %164 = vmatprep.mubr.f32.mxu0 0.0
    %165 = vmatmul.mubr.f32.gmra.mxu0 %v45
    %v166 = vpop.f32.mrf.mxu0
    %v167 = vadd.f32 %v38, %v166
    %v168 = vpop.f32.mrf.mxu0
    %169 = vdwg.mxu0
    %v170 = vmul.f32 %v162, %v162
    %v171 = vmul.f32 %v167, %v167
    %v172 = vmul.f32 %v162, %v170
    %v173 = vmul.f32 %v167, %v171
    %v174 = vmul.f32 %v172, 0.044715
    %v175 = vmul.f32 %v173, 0.044715
    %v176 = vadd.f32 %v162, %v174
    %v177 = vadd.f32 %v167, %v175
    %v178 = vmul.f32 %v176, 0.7978846
    %v179 = vmul.f32 %v177, 0.7978846
    %v180 = vtanh.pop %v178
    %v181 = vtanh.pop %v179
    %v182 = vadd.f32 %v180, 1.0
    %v183 = vadd.f32 %v181, 1.0
    %v184 = vmul.f32 %v182, 0.5
    %v185 = vmul.f32 %v183, 0.5
    %v186 = vmul.f32 %v162, %v184
    %v187 = vmul.f32 %v167, %v185
    %188 = vst [vmem:[#allocation2] sm:$0xff] %v186
    %189 = vst [vmem:[#allocation2 + $0x8] sm:$0xff] %v187
    // Predicated region
    $region14: #{vit_intermediate.1} parent=1 // pred_check
      _
    $region15: #{vit_intermediate.1} parent=1 // pred_check_branch
      %191 = sbr.rel (0) target = $region17
    $region16: #{vit_intermediate.1} parent=1 // pred_region
      %s193 = ssub.s32 256, 256
      %194 = vsyncadd [#allocation3], %s193
      %s195 = sshll.u32 [#allocation2], 4
      %s196 = int_to_ptr.vmem [resolvable:$true] %s195
      %201 = dma.vmem_to_hbm [thread:$0]  %s196, 256, %s3, [#allocation3], 128, 128, 8
    $region17: #{vit_intermediate.1} parent=1 // pred_fallthru
      _
    // Predicated region
    $region18: #{vit_intermediate.1} parent=1 // pred_check
      _
    $region19: #{vit_intermediate.1} parent=1 // pred_check_branch
      %203 = sbr.rel (0) target = $region21
    $region20: #{vit_intermediate.1} parent=1 // pred_region
      %204 = dma.done [#allocation3], 256
    $region21: #{vit_intermediate.1} parent=1 // pred_fallthru
      _
    %205 = vsyncpa [#allocation3], 1

</llo_original>
